<compile_context>
chip_gen: v6e
topology: v6e:2x2x1
jax: 0.10.0
libtpu: 0.0.40
codegen_flags: <defaults>
</compile_context>

<pallas_src>
import functools
import math

import jax
import jax.numpy as jnp
from jax import lax
from jax.experimental import pallas as pl
from jax.experimental.pallas import tpu as pltpu


def _round_up(x, m):
    return (x + m - 1) // m * m


# ---------------------------------------------------------------------------
# Fused Pallas kernel: (x @ W1 + b1).relu() @ W2 + b2, plus log_softmax
# ---------------------------------------------------------------------------
def _dnn_kernel(x_ref, w1_ref, b1_ref, w2_ref, b2_ref,
                logit_ref, logp_ref, *, out_dim):
    # fc1 + bias + ReLU (bf16 MXU matmul, f32 accumulate)
    h = jnp.dot(x_ref[...], w1_ref[...], preferred_element_type=jnp.float32)
    h = jnp.maximum(h + b1_ref[...], 0.0)

    # last layer (hidden stays in VMEM/vregs, never hits HBM)
    logits = jnp.dot(h.astype(jnp.bfloat16), w2_ref[...],
                     preferred_element_type=jnp.float32)
    logits = logits + b2_ref[...]
    logit_ref[...] = logits

    # log_softmax over the valid (unpadded) output columns only
    col = lax.broadcasted_iota(jnp.int32, logits.shape, 1)
    masked = jnp.where(col < out_dim, logits, jnp.float32(-1e30))
    m = jnp.max(masked, axis=-1, keepdims=True)
    lse = m + jnp.log(jnp.sum(jnp.exp(masked - m), axis=-1, keepdims=True))
    logp_ref[...] = logits - lse


# ---------------------------------------------------------------------------
# Parameter init (PyTorch nn.Linear layout + init) and one-time prep
# ---------------------------------------------------------------------------
def init_params(key, input_dim=784, mid_dim=100, output_dim=10):
    ks = jax.random.split(key, 4)

    def u(k, shape, fan_in):
        bound = 1.0 / math.sqrt(fan_in)
        return jax.random.uniform(k, shape, jnp.float32, -bound, bound)

    return {
        "fc1_w": u(ks[0], (mid_dim, input_dim), input_dim),   # PyTorch (out, in)
        "fc1_b": u(ks[1], (mid_dim,), input_dim),
        "last_w": u(ks[2], (output_dim, mid_dim), mid_dim),
        "last_b": u(ks[3], (output_dim,), mid_dim),
    }


def prepare_params(params):
    """One-time: transpose to (in, out), zero-pad widths to 128, cast to bf16."""
    mid_dim, in_dim = params["fc1_w"].shape
    out_dim = params["last_w"].shape[0]
    hp = _round_up(mid_dim, 128)
    npad = _round_up(out_dim, 128)

    w1 = jnp.zeros((in_dim, hp), jnp.float32).at[:, :mid_dim].set(params["fc1_w"].T)
    b1 = jnp.zeros((1, hp), jnp.float32).at[:, :mid_dim].set(params["fc1_b"])
    w2 = jnp.zeros((hp, npad), jnp.float32).at[:mid_dim, :out_dim].set(params["last_w"].T)
    b2 = jnp.zeros((1, npad), jnp.float32).at[:, :out_dim].set(params["last_b"])

    return {
        "w1": w1.astype(jnp.bfloat16),
        "b1": b1,
        "w2": w2.astype(jnp.bfloat16),
        "b2": b2,
        "in_dim": in_dim,
        "mid_dim": mid_dim,
        "out_dim": out_dim,
    }


# ---------------------------------------------------------------------------
# Forward (matches DNN.forward: returns {'output': log_softmax, 'logit': x})
# ---------------------------------------------------------------------------
def dnn_forward(x, prep):
    B = x.shape[0]
    xf = x.reshape(B, -1).astype(jnp.float32)          # torch.flatten(x, 1)
    K = xf.shape[1]
    assert K == prep["in_dim"]
    hp = prep["w1"].shape[1]
    npad = prep["w2"].shape[1]
    out_dim = prep["out_dim"]

    # Tile the batch; pad rows so the M block satisfies the (8, 128) rule.
    tm = 256 if B >= 256 else _round_up(B, 8)
    m_pad = _round_up(B, tm)
    if m_pad != B:
        xf = jnp.pad(xf, ((0, m_pad - B), (0, 0)))
    x_bf16 = xf.astype(jnp.bfloat16)

    kernel = functools.partial(_dnn_kernel, out_dim=out_dim)
    logits_p, logp_p = pl.pallas_call(
        kernel,
        out_shape=(jax.ShapeDtypeStruct((m_pad, npad), jnp.float32),
                   jax.ShapeDtypeStruct((m_pad, npad), jnp.float32)),
        grid=(m_pad // tm,),
        in_specs=[
            pl.BlockSpec((tm, K), lambda i: (i, 0)),     # activations: tiled over M
            pl.BlockSpec((K, hp), lambda i: (0, 0)),     # W1: resident
            pl.BlockSpec((1, hp), lambda i: (0, 0)),     # b1
            pl.BlockSpec((hp, npad), lambda i: (0, 0)),  # W2: resident
            pl.BlockSpec((1, npad), lambda i: (0, 0)),   # b2
        ],
        out_specs=(pl.BlockSpec((tm, npad), lambda i: (i, 0)),
                   pl.BlockSpec((tm, npad), lambda i: (i, 0))),
        compiler_params=pltpu.CompilerParams(
            dimension_semantics=("parallel",)),
    )(x_bf16, prep["w1"], prep["b1"], prep["w2"], prep["b2"])

    logits = logits_p[:B, :out_dim]
    log_probs = logp_p[:B, :out_dim]
    return {"output": log_probs, "logit": logits}


# ---------------------------------------------------------------------------
# Pure-JAX reference for a numerical sanity check
# ---------------------------------------------------------------------------
def ref_forward(x, p):
    B = x.shape[0]
    xf = x.reshape(B, -1)
    h = jnp.maximum(xf @ p["fc1_w"].T + p["fc1_b"], 0.0)
    logits = h @ p["last_w"].T + p["last_b"]
    return {"output": jax.nn.log_softmax(logits, axis=1), "logit": logits}


if __name__ == "__main__":
    key = jax.random.PRNGKey(0)
    pkey, xkey = jax.random.split(key)

    input_dim, mid_dim, output_dim = 784, 100, 10
    params = init_params(pkey, input_dim, mid_dim, output_dim)
    prep = prepare_params(params)

    # MNIST-like input; flatten(x, 1) -> (2, 784)
    x = jax.random.normal(xkey, (2, 1, 28, 28), dtype=jnp.float32)

    fwd = jax.jit(lambda xx: dnn_forward(xx, prep))
    out = fwd(x)
    out = jax.block_until_ready(out)

    ref = ref_forward(x, params)
    assert out["logit"].shape == (2, output_dim)
    assert out["output"].shape == (2, output_dim)
    assert jnp.all(jnp.isfinite(out["logit"]))
    assert jnp.all(jnp.isfinite(out["output"]))
    # bf16 matmul operands consume part of the tolerance
    assert jnp.allclose(out["logit"], ref["logit"], rtol=3e-2, atol=3e-2)
    assert jnp.allclose(out["output"], ref["output"], rtol=3e-2, atol=3e-2)

    print("KERNEL_OK")
</pallas_src>

<mosaic_0001>
module attributes {stable_mosaic.version = 11 : i64} {
  func.func @_dnn_kernel(%arg0: i32, %arg1: memref<8x784xbf16, #tpu.memory_space<vmem>>, %arg2: memref<784x128xbf16, #tpu.memory_space<vmem>>, %arg3: memref<1x128xf32, #tpu.memory_space<vmem>>, %arg4: memref<128x128xbf16, #tpu.memory_space<vmem>>, %arg5: memref<1x128xf32, #tpu.memory_space<vmem>>, %arg6: memref<8x128xf32, #tpu.memory_space<vmem>>, %arg7: memref<8x128xf32, #tpu.memory_space<vmem>>) attributes {dimension_semantics = [#tpu.dimension_semantics<parallel>], iteration_bounds = array<i64: 1>, scalar_prefetch = 0 : i64, scratch_operands = 0 : i64, tpu.core_type = #tpu.core_type<tc>, window_params = [{transform_indices = @transform_0, window_bounds = array<i64: 8, 784>}, {pipeline_mode = #tpu.pipeline_mode<synchronous>, transform_indices = @transform_1, window_bounds = array<i64: 784, 128>}, {pipeline_mode = #tpu.pipeline_mode<synchronous>, transform_indices = @transform_2, window_bounds = array<i64: 1, 128>}, {pipeline_mode = #tpu.pipeline_mode<synchronous>, transform_indices = @transform_3, window_bounds = array<i64: 128, 128>}, {pipeline_mode = #tpu.pipeline_mode<synchronous>, transform_indices = @transform_4, window_bounds = array<i64: 1, 128>}, {transform_indices = @transform_5, window_bounds = array<i64: 8, 128>}, {transform_indices = @transform_6, window_bounds = array<i64: 8, 128>}]} {
    %c0 = arith.constant 0 : index
    %c0_0 = arith.constant 0 : index
    %0 = vector.load %arg1[%c0, %c0_0] : memref<8x784xbf16, #tpu.memory_space<vmem>>, vector<8x784xbf16>
    %c0_1 = arith.constant 0 : index
    %c0_2 = arith.constant 0 : index
    %1 = vector.load %arg2[%c0_1, %c0_2] : memref<784x128xbf16, #tpu.memory_space<vmem>>, vector<784x128xbf16>
    %cst = arith.constant dense<0.000000e+00> : vector<8x128xf32>
    %2 = tpu.matmul %0, %1, %cst {dimension_numbers = #tpu.dot_dimension_numbers<[1], [0], [0], [1], [0, 0, 1, 1], [], []>} : vector<8x784xbf16>, vector<784x128xbf16>, vector<8x128xf32> -> vector<8x128xf32>
    %c0_3 = arith.constant 0 : index
    %c0_4 = arith.constant 0 : index
    %3 = vector.load %arg3[%c0_3, %c0_4] : memref<1x128xf32, #tpu.memory_space<vmem>>, vector<1x128xf32>
    %4 = vector.broadcast %3 : vector<1x128xf32> to vector<8x128xf32>
    %5 = arith.addf %2, %4 : vector<8x128xf32>
    %cst_5 = arith.constant 0.000000e+00 : f32
    %6 = vector.broadcast %cst_5 : f32 to vector<8x128xf32>
    %7 = arith.maximumf %5, %6 : vector<8x128xf32>
    %8 = arith.truncf %7 : vector<8x128xf32> to vector<8x128xbf16>
    %c0_6 = arith.constant 0 : index
    %c0_7 = arith.constant 0 : index
    %9 = vector.load %arg4[%c0_6, %c0_7] : memref<128x128xbf16, #tpu.memory_space<vmem>>, vector<128x128xbf16>
    %cst_8 = arith.constant dense<0.000000e+00> : vector<8x128xf32>
    %10 = tpu.matmul %8, %9, %cst_8 {dimension_numbers = #tpu.dot_dimension_numbers<[1], [0], [0], [1], [0, 0, 1, 1], [], []>} : vector<8x128xbf16>, vector<128x128xbf16>, vector<8x128xf32> -> vector<8x128xf32>
    %c0_9 = arith.constant 0 : index
    %c0_10 = arith.constant 0 : index
    %11 = vector.load %arg5[%c0_9, %c0_10] : memref<1x128xf32, #tpu.memory_space<vmem>>, vector<1x128xf32>
    %12 = vector.broadcast %11 : vector<1x128xf32> to vector<8x128xf32>
    %13 = arith.addf %10, %12 : vector<8x128xf32>
    %c0_11 = arith.constant 0 : index
    %c0_12 = arith.constant 0 : index
    %14 = vector.load %arg6[%c0_11, %c0_12] : memref<8x128xf32, #tpu.memory_space<vmem>>, vector<8x128xf32>
    tpu.vector_store %arg6[%c0_11, %c0_12], %13 {strides = array<i32>} : memref<8x128xf32, #tpu.memory_space<vmem>>, vector<8x128xf32>,
    %15 = tpu.iota {dimensions = array<i32: 1>} : vector<8x128xi32>
    %c10_i32 = arith.constant 10 : i32
    %16 = vector.broadcast %c10_i32 : i32 to vector<8x128xi32>
    %17 = arith.cmpi slt, %15, %16 : vector<8x128xi32>
    %cst_13 = arith.constant -1.000000e+30 : f32
    %18 = vector.broadcast %cst_13 : f32 to vector<8x128xf32>
    %19 = arith.select %17, %13, %18 : vector<8x128xi1>, vector<8x128xf32>
    %cst_14 = arith.constant dense<0xFF800000> : vector<8xf32>
    %20 = vector.multi_reduction <maximumf>, %19, %cst_14 [1] : vector<8x128xf32> to vector<8xf32>
    %21 = vector.shape_cast %20 : vector<8xf32> to vector<8x1xf32>
    %22 = vector.broadcast %21 : vector<8x1xf32> to vector<8x128xf32>
    %23 = arith.subf %19, %22 : vector<8x128xf32>
    %24 = math.exp %23 : vector<8x128xf32>
    %cst_15 = arith.constant dense<0.000000e+00> : vector<8xf32>
    %25 = vector.multi_reduction <add>, %24, %cst_15 [1] : vector<8x128xf32> to vector<8xf32>
    %26 = vector.shape_cast %25 : vector<8xf32> to vector<8x1xf32>
    %27 = math.log %26 : vector<8x1xf32>
    %28 = arith.addf %21, %27 : vector<8x1xf32>
    %29 = vector.broadcast %28 : vector<8x1xf32> to vector<8x128xf32>
    %30 = arith.subf %13, %29 : vector<8x128xf32>
    %c0_16 = arith.constant 0 : index
    %c0_17 = arith.constant 0 : index
    %31 = vector.load %arg7[%c0_16, %c0_17] : memref<8x128xf32, #tpu.memory_space<vmem>>, vector<8x128xf32>
    tpu.vector_store %arg7[%c0_16, %c0_17], %30 {strides = array<i32>} : memref<8x128xf32, #tpu.memory_space<vmem>>, vector<8x128xf32>,
    return
  }
  func.func @transform_0(%arg0: i32) -> (i32, i32) {
    %c0_i32 = arith.constant 0 : i32
    %c0_i32_0 = arith.constant 0 : i32
    return %arg0, %c0_i32 : i32, i32
  }
  func.func @transform_1(%arg0: i32) -> (i32, i32) {
    %c0_i32 = arith.constant 0 : i32
    %c0_i32_0 = arith.constant 0 : i32
    %c0_i32_1 = arith.constant 0 : i32
    return %c0_i32, %c0_i32_0 : i32, i32
  }
  func.func @transform_2(%arg0: i32) -> (i32, i32) {
    %c0_i32 = arith.constant 0 : i32
    %c0_i32_0 = arith.constant 0 : i32
    %c0_i32_1 = arith.constant 0 : i32
    return %c0_i32, %c0_i32_0 : i32, i32
  }
  func.func @transform_3(%arg0: i32) -> (i32, i32) {
    %c0_i32 = arith.constant 0 : i32
    %c0_i32_0 = arith.constant 0 : i32
    %c0_i32_1 = arith.constant 0 : i32
    return %c0_i32, %c0_i32_0 : i32, i32
  }
  func.func @transform_4(%arg0: i32) -> (i32, i32) {
    %c0_i32 = arith.constant 0 : i32
    %c0_i32_0 = arith.constant 0 : i32
    %c0_i32_1 = arith.constant 0 : i32
    return %c0_i32, %c0_i32_0 : i32, i32
  }
  func.func @transform_5(%arg0: i32) -> (i32, i32) {
    %c0_i32 = arith.constant 0 : i32
    %c0_i32_0 = arith.constant 0 : i32
    return %arg0, %c0_i32 : i32, i32
  }
  func.func @transform_6(%arg0: i32) -> (i32, i32) {
    %c0_i32 = arith.constant 0 : i32
    %c0_i32_0 = arith.constant 0 : i32
    return %arg0, %c0_i32 : i32, i32
  }
}

</mosaic_0001>

<llo_original>
// kernel: _lambda_.1
$region0: #{_lambda_.1}
  #allocation0 [shape = 'u32[]', space=smem, size = 0x4, offset = 0x4, fixed_abs, tag = 'smem constant byte address 0x4 - core index']
  #allocation1 [shape = 'u32[144,128]{1,0:T(1,128)}', space=vmem, size = 0x12000, scoped, tag = 'internal scratch']
  %s0 = inlined_call_operand.vmem [shape: bf16[8,784], index: 0, kind: input, shape index: {}]
  %s1 = inlined_call_operand.hbm [shape: bf16[784,128], index: 1, kind: input, shape index: {}]
  %s2 = inlined_call_operand.vmem [shape: f32[1,128], index: 2, kind: input, shape index: {}]
  %s3 = inlined_call_operand.vmem [shape: bf16[128,128], index: 3, kind: input, shape index: {}]
  %s4 = inlined_call_operand.vmem [shape: f32[1,128], index: 4, kind: input, shape index: {}]
  %s5 = inlined_call_operand.vmem [shape: f32[8,128], index: 5, kind: output, shape index: {0}]
  %s6 = inlined_call_operand.vmem [shape: f32[8,128], index: 6, kind: output, shape index: {1}]
  %7 = xla_tuple %s5, %s6
  %s8 = sld [smem:[#allocation0]]
  $region42: #{_lambda_.1} parent=0
    _
  %s10 = ssub.s32 1, %s8
  %s11 = scalar_select 0, %s10, %s8
  $region1: #{_lambda_.1} parent=0
    #allocation2 [shape = 'u8[200704]{0}', space=vmem, size = 0x31000, scoped, tag = 'input window, operand 1, single buffered']
    #allocation3 [shape = 's32[1]{0}', space=sflag, size = 0x4, scoped, tag = 'scoped memory for _lambda_.1']
    %12 = vsyncpa [#allocation3], 0
    // Predicated region
    $region2: #{_lambda_.1} parent=1 // pred_check
      _
    $region3: #{_lambda_.1} parent=1 // pred_check_branch
      %14 = sbr.rel (0) target = $region5
    $region4: #{_lambda_.1} parent=1 // pred_region
      _
    $region5: #{_lambda_.1} parent=1 // pred_fallthru
      _
    // Predicated region
    $region6: #{_lambda_.1} parent=1 // pred_check
      _
    $region7: #{_lambda_.1} parent=1 // pred_check_branch
      %16 = sbr.rel (0) target = $region9
    $region8: #{_lambda_.1} parent=1 // pred_region
      %s18 = ssub.s32 6272, 6272
      %19 = vsyncadd [#allocation3], %s18
      %s20 = sshll.u32 [#allocation2], 4
      %s21 = int_to_ptr.vmem [resolvable:$true] %s20
      %26 = dma.hbm_to_vmem [thread:$0]  %s1, 6272, %s21, [#allocation3], 64, 64, 4
    $region9: #{_lambda_.1} parent=1 // pred_fallthru
      _
    // Predicated region
    $region10: #{_lambda_.1} parent=1 // pred_check
      _
    $region11: #{_lambda_.1} parent=1 // pred_check_branch
      %28 = sbr.rel (0) target = $region13
    $region12: #{_lambda_.1} parent=1 // pred_region
      _
    $region13: #{_lambda_.1} parent=1 // pred_fallthru
      _
    // Predicated region
    $region14: #{_lambda_.1} parent=1 // pred_check
      _
    $region15: #{_lambda_.1} parent=1 // pred_check_branch
      %30 = sbr.rel (0) target = $region17
    $region16: #{_lambda_.1} parent=1 // pred_region
      _
    $region17: #{_lambda_.1} parent=1 // pred_fallthru
      _
    // Predicated region
    $region18: #{_lambda_.1} parent=1 // pred_check
      _
    $region19: #{_lambda_.1} parent=1 // pred_check_branch
      %32 = sbr.rel (0) target = $region21
    $region20: #{_lambda_.1} parent=1 // pred_region
      _
    $region21: #{_lambda_.1} parent=1 // pred_fallthru
      _
    // Predicated region
    $region22: #{_lambda_.1} parent=1 // pred_check
      _
    $region23: #{_lambda_.1} parent=1 // pred_check_branch
      %34 = sbr.rel (0) target = $region25
    $region24: #{_lambda_.1} parent=1 // pred_region
      %35 = dma.done [#allocation3], 6272
    $region25: #{_lambda_.1} parent=1 // pred_fallthru
      _
    %v37 = vld [vmem:[%s0] sm:$0xff]
    %v38 = vld [vmem:[%s0 + $0x8] sm:$0xff]
    %v39 = vld [vmem:[%s0 + $0x10] sm:$0xff]
    %v40 = vld [vmem:[%s0 + $0x18] sm:$0xf]
    %v41 = vld [vmem:[#allocation2] sm:$0xf]
    %v42 = vld [vmem:[#allocation2 + $0x4] sm:$0xf]
    %v43 = vld [vmem:[#allocation2 + $0x8] sm:$0xf]
    %v44 = vld [vmem:[#allocation2 + $0xc] sm:$0xf]
    %v45 = vld [vmem:[#allocation2 + $0x10] sm:$0xf]
    %v46 = vld [vmem:[#allocation2 + $0x14] sm:$0xf]
    %v47 = vld [vmem:[#allocation2 + $0x18] sm:$0xf]
    %v48 = vld [vmem:[#allocation2 + $0x1c] sm:$0xf]
    %v49 = vld [vmem:[#allocation2 + $0x20] sm:$0xf]
    %v50 = vld [vmem:[#allocation2 + $0x24] sm:$0xf]
    %v51 = vld [vmem:[#allocation2 + $0x28] sm:$0xf]
    %v52 = vld [vmem:[#allocation2 + $0x2c] sm:$0xf]
    %v53 = vld [vmem:[#allocation2 + $0x30] sm:$0xf]
    %v54 = vld [vmem:[#allocation2 + $0x34] sm:$0xf]
    %v55 = vld [vmem:[#allocation2 + $0x38] sm:$0xf]
    %v56 = vld [vmem:[#allocation2 + $0x3c] sm:$0xf]
    %v57 = vld [vmem:[#allocation2 + $0x40] sm:$0xf]
    %v58 = vld [vmem:[#allocation2 + $0x44] sm:$0xf]
    %v59 = vld [vmem:[#allocation2 + $0x48] sm:$0xf]
    %v60 = vld [vmem:[#allocation2 + $0x4c] sm:$0xf]
    %v61 = vld [vmem:[#allocation2 + $0x50] sm:$0xf]
    %v62 = vld [vmem:[#allocation2 + $0x54] sm:$0xf]
    %v63 = vld [vmem:[#allocation2 + $0x58] sm:$0xf]
    %v64 = vld [vmem:[#allocation2 + $0x5c] sm:$0xf]
    %v65 = vld [vmem:[#allocation2 + $0x60] sm:$0xf]
    %v66 = vld [vmem:[#allocation2 + $0x64] sm:$0xf]
    %v67 = vld [vmem:[#allocation2 + $0x68] sm:$0xf]
    %v68 = vld [vmem:[#allocation2 + $0x6c] sm:$0xf]
    %v69 = vld [vmem:[#allocation2 + $0x70] sm:$0xf]
    %v70 = vld [vmem:[#allocation2 + $0x74] sm:$0xf]
    %v71 = vld [vmem:[#allocation2 + $0x78] sm:$0xf]
    %v72 = vld [vmem:[#allocation2 + $0x7c] sm:$0xf]
    %v73 = vld [vmem:[#allocation2 + $0x80] sm:$0xf]
    %v74 = vld [vmem:[#allocation2 + $0x84] sm:$0xf]
    %v75 = vld [vmem:[#allocation2 + $0x88] sm:$0xf]
    %v76 = vld [vmem:[#allocation2 + $0x8c] sm:$0xf]
    %v77 = vld [vmem:[#allocation2 + $0x90] sm:$0xf]
    %v78 = vld [vmem:[#allocation2 + $0x94] sm:$0xf]
    %v79 = vld [vmem:[#allocation2 + $0x98] sm:$0xf]
    %v80 = vld [vmem:[#allocation2 + $0x9c] sm:$0xf]
    %v81 = vld [vmem:[#allocation2 + $0xa0] sm:$0xf]
    %v82 = vld [vmem:[#allocation2 + $0xa4] sm:$0xf]
    %v83 = vld [vmem:[#allocation2 + $0xa8] sm:$0xf]
    %v84 = vld [vmem:[#allocation2 + $0xac] sm:$0xf]
    %v85 = vld [vmem:[#allocation2 + $0xb0] sm:$0xf]
    %v86 = vld [vmem:[#allocation2 + $0xb4] sm:$0xf]
    %v87 = vld [vmem:[#allocation2 + $0xb8] sm:$0xf]
    %v88 = vld [vmem:[#allocation2 + $0xbc] sm:$0xf]
    %v89 = vld [vmem:[#allocation2 + $0xc0] sm:$0xf]
    %v90 = vld [vmem:[#allocation2 + $0xc4] sm:$0xf]
    %v91 = vld [vmem:[#allocation2 + $0xc8] sm:$0xf]
    %v92 = vld [vmem:[#allocation2 + $0xcc] sm:$0xf]
    %v93 = vld [vmem:[#allocation2 + $0xd0] sm:$0xf]
    %v94 = vld [vmem:[#allocation2 + $0xd4] sm:$0xf]
    %v95 = vld [vmem:[#allocation2 + $0xd8] sm:$0xf]
    %v96 = vld [vmem:[#allocation2 + $0xdc] sm:$0xf]
    %v97 = vld [vmem:[#allocation2 + $0xe0] sm:$0xf]
    %v98 = vld [vmem:[#allocation2 + $0xe4] sm:$0xf]
    %v99 = vld [vmem:[#allocation2 + $0xe8] sm:$0xf]
    %v100 = vld [vmem:[#allocation2 + $0xec] sm:$0xf]
    %v101 = vld [vmem:[#allocation2 + $0xf0] sm:$0xf]
    %v102 = vld [vmem:[#allocation2 + $0xf4] sm:$0xf]
    %v103 = vld [vmem:[#allocation2 + $0xf8] sm:$0xf]
    %v104 = vld [vmem:[#allocation2 + $0xfc] sm:$0xf]
    %v105 = vld [vmem:[#allocation2 + $0x100] sm:$0xf]
    %v106 = vld [vmem:[#allocation2 + $0x104] sm:$0xf]
    %v107 = vld [vmem:[#allocation2 + $0x108] sm:$0xf]
    %v108 = vld [vmem:[#allocation2 + $0x10c] sm:$0xf]
    %v109 = vld [vmem:[#allocation2 + $0x110] sm:$0xf]
    %v110 = vld [vmem:[#allocation2 + $0x114] sm:$0xf]
    %v111 = vld [vmem:[#allocation2 + $0x118] sm:$0xf]
    %v112 = vld [vmem:[#allocation2 + $0x11c] sm:$0xf]
    %v113 = vld [vmem:[#allocation2 + $0x120] sm:$0xf]
    %v114 = vld [vmem:[#allocation2 + $0x124] sm:$0xf]
    %v115 = vld [vmem:[#allocation2 + $0x128] sm:$0xf]
    %v116 = vld [vmem:[#allocation2 + $0x12c] sm:$0xf]
    %v117 = vld [vmem:[#allocation2 + $0x130] sm:$0xf]
    %v118 = vld [vmem:[#allocation2 + $0x134] sm:$0xf]
    %v119 = vld [vmem:[#allocation2 + $0x138] sm:$0xf]
    %v120 = vld [vmem:[#allocation2 + $0x13c] sm:$0xf]
    %v121 = vld [vmem:[#allocation2 + $0x140] sm:$0xf]
    %v122 = vld [vmem:[#allocation2 + $0x144] sm:$0xf]
    %v123 = vld [vmem:[#allocation2 + $0x148] sm:$0xf]
    %v124 = vld [vmem:[#allocation2 + $0x14c] sm:$0xf]
    %v125 = vld [vmem:[#allocation2 + $0x150] sm:$0xf]
    %v126 = vld [vmem:[#allocation2 + $0x154] sm:$0xf]
    %v127 = vld [vmem:[#allocation2 + $0x158] sm:$0xf]
    %v128 = vld [vmem:[#allocation2 + $0x15c] sm:$0xf]
    %v129 = vld [vmem:[#allocation2 + $0x160] sm:$0xf]
    %v130 = vld [vmem:[#allocation2 + $0x164] sm:$0xf]
    %v131 = vld [vmem:[#allocation2 + $0x168] sm:$0xf]
    %v132 = vld [vmem:[#allocation2 + $0x16c] sm:$0xf]
    %v133 = vld [vmem:[#allocation2 + $0x170] sm:$0xf]
    %v134 = vld [vmem:[#allocation2 + $0x174] sm:$0xf]
    %v135 = vld [vmem:[#allocation2 + $0x178] sm:$0xf]
    %v136 = vld [vmem:[#allocation2 + $0x17c] sm:$0xf]
    %v137 = vld [vmem:[#allocation2 + $0x180] sm:$0xf]
    %v138 = vld [vmem:[#allocation2 + $0x184] sm:$0xf]
    %v139 = vld [vmem:[%s2] sm:$0x1]
    %v141 = vlaneseq
    %v142 = vshrl.u32 %v141, 7
    %v143 = vsub.s32 0, %v142
    %v144 = vrot.slane %v139, %v143
    %v150 = vunpack.c.l.b16 %v37
    %v151 = vunpack.c.h.b16 %v37
    %v152 = vunpack.c.l.b16 %v38
    %v153 = vunpack.c.h.b16 %v38
    %v154 = vunpack.c.l.b16 %v39
    %v155 = vunpack.c.h.b16 %v39
    %v156 = vunpack.c.l.b16 %v40
    %v157 = vpack.c.b16 %v150, %v150
    %v158 = vpack.c.b16 %v151, %v151
    %v159 = vpack.c.b16 %v152, %v152
    %v160 = vpack.c.b16 %v153, %v153
    %v161 = vpack.c.b16 %v154, %v154
    %v162 = vpack.c.b16 %v155, %v155
    %v163 = vpack.c.b16 %v156, %v156
    %v268 = vunpack.c.l.b16 %v41
    %v269 = vunpack.c.l.b16 %v42
    %v270 = vunpack.c.l.b16 %v43
    %v271 = vunpack.c.l.b16 %v44
    %v272 = vunpack.c.l.b16 %v45
    %v273 = vunpack.c.l.b16 %v46
    %v274 = vunpack.c.l.b16 %v47
    %v275 = vunpack.c.l.b16 %v48
    %v276 = vunpack.c.l.b16 %v49
    %v277 = vunpack.c.l.b16 %v50
    %v278 = vunpack.c.l.b16 %v51
    %v279 = vunpack.c.l.b16 %v52
    %v280 = vunpack.c.l.b16 %v53
    %v281 = vunpack.c.l.b16 %v54
    %v282 = vunpack.c.l.b16 %v55
    %v283 = vunpack.c.l.b16 %v56
    %v284 = vunpack.c.l.b16 %v57
    %v285 = vunpack.c.l.b16 %v58
    %v286 = vunpack.c.l.b16 %v59
    %v287 = vunpack.c.l.b16 %v60
    %v288 = vunpack.c.l.b16 %v61
    %v289 = vunpack.c.l.b16 %v62
    %v290 = vunpack.c.l.b16 %v63
    %v291 = vunpack.c.l.b16 %v64
    %v292 = vunpack.c.l.b16 %v65
    %v293 = vunpack.c.l.b16 %v66
    %v294 = vunpack.c.l.b16 %v67
    %v295 = vunpack.c.l.b16 %v68
    %v296 = vunpack.c.l.b16 %v69
    %v297 = vunpack.c.l.b16 %v70
    %v298 = vunpack.c.l.b16 %v71
    %v299 = vunpack.c.l.b16 %v72
    %v300 = vunpack.c.l.b16 %v73
    %v301 = vunpack.c.l.b16 %v74
    %v302 = vunpack.c.l.b16 %v75
    %v303 = vunpack.c.l.b16 %v76
    %v304 = vunpack.c.l.b16 %v77
    %v305 = vunpack.c.l.b16 %v78
    %v306 = vunpack.c.l.b16 %v79
    %v307 = vunpack.c.l.b16 %v80
    %v308 = vunpack.c.l.b16 %v81
    %v309 = vunpack.c.l.b16 %v82
    %v310 = vunpack.c.l.b16 %v83
    %v311 = vunpack.c.l.b16 %v84
    %v312 = vunpack.c.l.b16 %v85
    %v313 = vunpack.c.l.b16 %v86
    %v314 = vunpack.c.l.b16 %v87
    %v315 = vunpack.c.l.b16 %v88
    %v316 = vunpack.c.l.b16 %v89
    %v317 = vunpack.c.l.b16 %v90
    %v318 = vunpack.c.l.b16 %v91
    %v319 = vunpack.c.l.b16 %v92
    %v320 = vunpack.c.l.b16 %v93
    %v321 = vunpack.c.l.b16 %v94
    %v322 = vunpack.c.l.b16 %v95
    %v323 = vunpack.c.l.b16 %v96
    %v324 = vunpack.c.l.b16 %v97
    %v325 = vunpack.c.l.b16 %v98
    %v326 = vunpack.c.l.b16 %v99
    %v327 = vunpack.c.l.b16 %v100
    %v328 = vunpack.c.l.b16 %v101
    %v329 = vunpack.c.l.b16 %v102
    %v330 = vunpack.c.l.b16 %v103
    %v331 = vunpack.c.l.b16 %v104
    %v332 = vunpack.c.l.b16 %v105
    %v333 = vunpack.c.l.b16 %v106
    %v334 = vunpack.c.l.b16 %v107
    %v335 = vunpack.c.l.b16 %v108
    %v336 = vunpack.c.l.b16 %v109
    %v337 = vunpack.c.l.b16 %v110
    %v338 = vunpack.c.l.b16 %v111
    %v339 = vunpack.c.l.b16 %v112
    %v340 = vunpack.c.l.b16 %v113
    %v341 = vunpack.c.l.b16 %v114
    %v342 = vunpack.c.l.b16 %v115
    %v343 = vunpack.c.l.b16 %v116
    %v344 = vunpack.c.l.b16 %v117
    %v345 = vunpack.c.l.b16 %v118
    %v346 = vunpack.c.l.b16 %v119
    %v347 = vunpack.c.l.b16 %v120
    %v348 = vunpack.c.l.b16 %v121
    %v349 = vunpack.c.l.b16 %v122
    %v350 = vunpack.c.l.b16 %v123
    %v351 = vunpack.c.l.b16 %v124
    %v352 = vunpack.c.l.b16 %v125
    %v353 = vunpack.c.l.b16 %v126
    %v354 = vunpack.c.l.b16 %v127
    %v355 = vunpack.c.l.b16 %v128
    %v356 = vunpack.c.l.b16 %v129
    %v357 = vunpack.c.l.b16 %v130
    %v358 = vunpack.c.l.b16 %v131
    %v359 = vunpack.c.l.b16 %v132
    %v360 = vunpack.c.l.b16 %v133
    %v361 = vunpack.c.l.b16 %v134
    %v362 = vunpack.c.l.b16 %v135
    %v363 = vunpack.c.l.b16 %v136
    %v364 = vunpack.c.l.b16 %v137
    %v365 = vunpack.c.l.b16 %v138
    %v366 = vpack.c.b16 %v269, %v268
    %v367 = vpack.c.b16 %v271, %v270
    %v368 = vpack.c.b16 %v273, %v272
    %v369 = vpack.c.b16 %v275, %v274
    %v370 = vpack.c.b16 %v277, %v276
    %v371 = vpack.c.b16 %v279, %v278
    %v372 = vpack.c.b16 %v281, %v280
    %v373 = vpack.c.b16 %v283, %v282
    %v374 = vpack.c.b16 %v285, %v284
    %v375 = vpack.c.b16 %v287, %v286
    %v376 = vpack.c.b16 %v289, %v288
    %v377 = vpack.c.b16 %v291, %v290
    %v378 = vpack.c.b16 %v293, %v292
    %v379 = vpack.c.b16 %v295, %v294
    %v380 = vpack.c.b16 %v297, %v296
    %v381 = vpack.c.b16 %v299, %v298
    %v382 = vpack.c.b16 %v301, %v300
    %v383 = vpack.c.b16 %v303, %v302
    %v384 = vpack.c.b16 %v305, %v304
    %v385 = vpack.c.b16 %v307, %v306
    %v386 = vpack.c.b16 %v309, %v308
    %v387 = vpack.c.b16 %v311, %v310
    %v388 = vpack.c.b16 %v313, %v312
    %v389 = vpack.c.b16 %v315, %v314
    %v390 = vpack.c.b16 %v317, %v316
    %v391 = vpack.c.b16 %v319, %v318
    %v392 = vpack.c.b16 %v321, %v320
    %v393 = vpack.c.b16 %v323, %v322
    %v394 = vpack.c.b16 %v325, %v324
    %v395 = vpack.c.b16 %v327, %v326
    %v396 = vpack.c.b16 %v329, %v328
    %v397 = vpack.c.b16 %v331, %v330
    %v398 = vpack.c.b16 %v333, %v332
    %v399 = vpack.c.b16 %v335, %v334
    %v400 = vpack.c.b16 %v337, %v336
    %v401 = vpack.c.b16 %v339, %v338
    %v402 = vpack.c.b16 %v341, %v340
    %v403 = vpack.c.b16 %v343, %v342
    %v404 = vpack.c.b16 %v345, %v344
    %v405 = vpack.c.b16 %v347, %v346
    %v406 = vpack.c.b16 %v349, %v348
    %v407 = vpack.c.b16 %v351, %v350
    %v408 = vpack.c.b16 %v353, %v352
    %v409 = vpack.c.b16 %v355, %v354
    %v410 = vpack.c.b16 %v357, %v356
    %v411 = vpack.c.b16 %v359, %v358
    %v412 = vpack.c.b16 %v361, %v360
    %v413 = vpack.c.b16 %v363, %v362
    %v414 = vpack.c.b16 %v365, %v364
    %vm464 = vcmask 130048
    %v466 = vsel %vm464, %v163, 0
    %468 = vmatprep.subr.bf16.mxu0 0
    %469 = vmatpush1.bf16.msra.mxu0 %v373
    %470 = vmatprep.subr.bf16.mxu0 0
    %471 = vmatpush1.bf16.msra.mxu0 %v372
    %472 = vmatprep.subr.bf16.mxu0 0
    %473 = vmatpush1.bf16.msra.mxu0 %v371
    %474 = vmatprep.subr.bf16.mxu0 0
    %475 = vmatpush1.bf16.msra.mxu0 %v370
    %476 = vmatprep.subr.bf16.mxu0 0
    %477 = vmatpush1.bf16.msra.mxu0 %v369
    %478 = vmatprep.subr.bf16.mxu0 0
    %479 = vmatpush1.bf16.msra.mxu0 %v368
    %480 = vmatprep.subr.bf16.mxu0 0
    %481 = vmatpush1.bf16.msra.mxu0 %v367
    %482 = vmatprep.subr.bf16.mxu0 0
    %483 = vmatpush1.bf16.msra.mxu0 %v366
    %484 = vmatprep.subr.bf16.mxu0 0
    %485 = vmatpush2.bf16.msra.mxu0 %v381
    %486 = vmatprep.subr.bf16.mxu0 0
    %487 = vmatpush2.bf16.msra.mxu0 %v380
    %488 = vmatprep.subr.bf16.mxu0 0
    %489 = vmatpush2.bf16.msra.mxu0 %v379
    %490 = vmatprep.subr.bf16.mxu0 0
    %491 = vmatpush2.bf16.msra.mxu0 %v378
    %492 = vmatprep.subr.bf16.mxu0 0
    %493 = vmatpush2.bf16.msra.mxu0 %v377
    %494 = vmatprep.subr.bf16.mxu0 0
    %495 = vmatpush2.bf16.msra.mxu0 %v376
    %496 = vmatprep.subr.bf16.mxu0 0
    %497 = vmatpush2.bf16.msra.mxu0 %v375
    %498 = vmatprep.subr.bf16.mxu0 0
    %499 = vmatpush2.bf16.msra.mxu0 %v374
    %500 = vmatprep.mubr.bf16.mxu0 %v158
    %501 = vmatmul.mubr.bf16.gmra.mxu0 %v157
    %v502 = vpop.f32.mrf.mxu0
    %v503 = vadd.f32 %v144, %v502
    %v504 = vpop.f32.mrf.mxu0
    %v505 = vpop.f32.mrf.mxu0
    %v506 = vpop.f32.mrf.mxu0
    %507 = vdwg.mxu0
    %508 = vmatprep.subr.bf16.mxu0 0
    %509 = vmatpush1.bf16.msra.mxu0 %v389
    %510 = vmatprep.subr.bf16.mxu0 0
    %511 = vmatpush1.bf16.msra.mxu0 %v388
    %512 = vmatprep.subr.bf16.mxu0 0
    %513 = vmatpush1.bf16.msra.mxu0 %v387
    %514 = vmatprep.subr.bf16.mxu0 0
    %515 = vmatpush1.bf16.msra.mxu0 %v386
    %516 = vmatprep.subr.bf16.mxu0 0
    %517 = vmatpush1.bf16.msra.mxu0 %v385
    %518 = vmatprep.subr.bf16.mxu0 0
    %519 = vmatpush1.bf16.msra.mxu0 %v384
    %520 = vmatprep.subr.bf16.mxu0 0
    %521 = vmatpush1.bf16.msra.mxu0 %v383
    %522 = vmatprep.subr.bf16.mxu0 0
    %523 = vmatpush1.bf16.msra.mxu0 %v382
    %524 = vmatprep.subr.bf16.mxu0 0
    %525 = vmatpush2.bf16.msra.mxu0 %v397
    %526 = vmatprep.subr.bf16.mxu0 0
    %527 = vmatpush2.bf16.msra.mxu0 %v396
    %528 = vmatprep.subr.bf16.mxu0 0
    %529 = vmatpush2.bf16.msra.mxu0 %v395
    %530 = vmatprep.subr.bf16.mxu0 0
    %531 = vmatpush2.bf16.msra.mxu0 %v394
    %532 = vmatprep.subr.bf16.mxu0 0
    %533 = vmatpush2.bf16.msra.mxu0 %v393
    %534 = vmatprep.subr.bf16.mxu0 0
    %535 = vmatpush2.bf16.msra.mxu0 %v392
    %536 = vmatprep.subr.bf16.mxu0 0
    %537 = vmatpush2.bf16.msra.mxu0 %v391
    %538 = vmatprep.subr.bf16.mxu0 0
    %539 = vmatpush2.bf16.msra.mxu0 %v390
    %540 = vmatprep.mubr.bf16.mxu0 %v160
    %541 = vmatmul.mubr.bf16.gmra.mxu0 %v159
    %v542 = vpop.f32.mrf.mxu0
    %v543 = vadd.f32 %v503, %v542
    %v544 = vpop.f32.mrf.mxu0
    %v545 = vpop.f32.mrf.mxu0
    %v546 = vpop.f32.mrf.mxu0
    %547 = vdwg.mxu0
    %548 = vmatprep.subr.bf16.mxu0 0
    %549 = vmatpush1.bf16.msra.mxu0 %v405
    %550 = vmatprep.subr.bf16.mxu0 0
    %551 = vmatpush1.bf16.msra.mxu0 %v404
    %552 = vmatprep.subr.bf16.mxu0 0
    %553 = vmatpush1.bf16.msra.mxu0 %v403
    %554 = vmatprep.subr.bf16.mxu0 0
    %555 = vmatpush1.bf16.msra.mxu0 %v402
    %556 = vmatprep.subr.bf16.mxu0 0
    %557 = vmatpush1.bf16.msra.mxu0 %v401
    %558 = vmatprep.subr.bf16.mxu0 0
    %559 = vmatpush1.bf16.msra.mxu0 %v400
    %560 = vmatprep.subr.bf16.mxu0 0
    %561 = vmatpush1.bf16.msra.mxu0 %v399
    %562 = vmatprep.subr.bf16.mxu0 0
    %563 = vmatpush1.bf16.msra.mxu0 %v398
    %564 = vmatprep.subr.bf16.mxu0 0
    %565 = vmatpush2.bf16.msra.mxu0 %v413
    %566 = vmatprep.subr.bf16.mxu0 0
    %567 = vmatpush2.bf16.msra.mxu0 %v412
    %568 = vmatprep.subr.bf16.mxu0 0
    %569 = vmatpush2.bf16.msra.mxu0 %v411
    %570 = vmatprep.subr.bf16.mxu0 0
    %571 = vmatpush2.bf16.msra.mxu0 %v410
    %572 = vmatprep.subr.bf16.mxu0 0
    %573 = vmatpush2.bf16.msra.mxu0 %v409
    %574 = vmatprep.subr.bf16.mxu0 0
    %575 = vmatpush2.bf16.msra.mxu0 %v408
    %576 = vmatprep.subr.bf16.mxu0 0
    %577 = vmatpush2.bf16.msra.mxu0 %v407
    %578 = vmatprep.subr.bf16.mxu0 0
    %579 = vmatpush2.bf16.msra.mxu0 %v406
    %580 = vmatprep.mubr.bf16.mxu0 %v162
    %581 = vmatmul.mubr.bf16.gmra.mxu0 %v161
    %v582 = vpop.f32.mrf.mxu0
    %v583 = vadd.f32 %v543, %v582
    %v584 = vpop.f32.mrf.mxu0
    %v585 = vpop.f32.mrf.mxu0
    %v586 = vpop.f32.mrf.mxu0
    %587 = vdwg.mxu0
    %588 = vmatprep.subr.bf16.mxu0 0
    %589 = vmatpush1.bf16.msra.mxu0 0
    %590 = vmatprep.subr.bf16.mxu0 0
    %591 = vmatpush1.bf16.msra.mxu0 0
    %592 = vmatprep.subr.bf16.mxu0 0
    %593 = vmatpush1.bf16.msra.mxu0 0
    %594 = vmatprep.subr.bf16.mxu0 0
    %595 = vmatpush1.bf16.msra.mxu0 0
    %596 = vmatprep.subr.bf16.mxu0 0
    %597 = vmatpush1.bf16.msra.mxu0 0
    %598 = vmatprep.subr.bf16.mxu0 0
    %599 = vmatpush1.bf16.msra.mxu0 0
    %600 = vmatprep.subr.bf16.mxu0 0
    %601 = vmatpush1.bf16.msra.mxu0 0
    %602 = vmatprep.subr.bf16.mxu0 0
    %603 = vmatpush1.bf16.msra.mxu0 %v414
    %604 = vmatprep.subr.bf16.mxu0 0
    %605 = vmatpush2.bf16.msra.mxu0 0
    %606 = vmatprep.subr.bf16.mxu0 0
    %607 = vmatpush2.bf16.msra.mxu0 0
    %608 = vmatprep.subr.bf16.mxu0 0
    %609 = vmatpush2.bf16.msra.mxu0 0
    %610 = vmatprep.subr.bf16.mxu0 0
    %611 = vmatpush2.bf16.msra.mxu0 0
    %612 = vmatprep.subr.bf16.mxu0 0
    %613 = vmatpush2.bf16.msra.mxu0 0
    %614 = vmatprep.subr.bf16.mxu0 0
    %615 = vmatpush2.bf16.msra.mxu0 0
    %616 = vmatprep.subr.bf16.mxu0 0
    %617 = vmatpush2.bf16.msra.mxu0 0
    %618 = vmatprep.subr.bf16.mxu0 0
    %619 = vmatpush2.bf16.msra.mxu0 0
    %620 = vmatprep.mubr.bf16.mxu0 0
    %621 = vmatmul.mubr.bf16.gmra.mxu0 %v466
    %v622 = vpop.f32.mrf.mxu0
    %v623 = vadd.f32 %v583, %v622
    %v624 = vpop.f32.mrf.mxu0
    %v625 = vpop.f32.mrf.mxu0
    %v626 = vpop.f32.mrf.mxu0
    %627 = vdwg.mxu0
    %v628 = vmax.f32 %v623, 0.0
    %v629 = vpack.c.bf16 %v628, %v628
    %v630 = vld [vmem:[%s3] sm:$0xf]
    %v631 = vld [vmem:[%s3 + $0x4] sm:$0xf]
    %v632 = vld [vmem:[%s3 + $0x8] sm:$0xf]
    %v633 = vld [vmem:[%s3 + $0xc] sm:$0xf]
    %v634 = vld [vmem:[%s3 + $0x10] sm:$0xf]
    %v635 = vld [vmem:[%s3 + $0x14] sm:$0xf]
    %v636 = vld [vmem:[%s3 + $0x18] sm:$0xf]
    %v637 = vld [vmem:[%s3 + $0x1c] sm:$0xf]
    %v638 = vld [vmem:[%s3 + $0x20] sm:$0xf]
    %v639 = vld [vmem:[%s3 + $0x24] sm:$0xf]
    %v640 = vld [vmem:[%s3 + $0x28] sm:$0xf]
    %v641 = vld [vmem:[%s3 + $0x2c] sm:$0xf]
    %v642 = vld [vmem:[%s3 + $0x30] sm:$0xf]
    %v643 = vld [vmem:[%s3 + $0x34] sm:$0xf]
    %v644 = vld [vmem:[%s3 + $0x38] sm:$0xf]
    %v645 = vld [vmem:[%s3 + $0x3c] sm:$0xf]
    %v646 = vld [vmem:[%s4] sm:$0x1]
    %v648 = vlaneseq
    %v649 = vshrl.u32 %v648, 7
    %v650 = vsub.s32 0, %v649
    %v651 = vrot.slane %v646, %v650
    %v669 = vunpack.c.l.b16 %v630
    %v670 = vunpack.c.l.b16 %v631
    %v671 = vunpack.c.l.b16 %v632
    %v672 = vunpack.c.l.b16 %v633
    %v673 = vunpack.c.l.b16 %v634
    %v674 = vunpack.c.l.b16 %v635
    %v675 = vunpack.c.l.b16 %v636
    %v676 = vunpack.c.l.b16 %v637
    %v677 = vunpack.c.l.b16 %v638
    %v678 = vunpack.c.l.b16 %v639
    %v679 = vunpack.c.l.b16 %v640
    %v680 = vunpack.c.l.b16 %v641
    %v681 = vunpack.c.l.b16 %v642
    %v682 = vunpack.c.l.b16 %v643
    %v683 = vunpack.c.l.b16 %v644
    %v684 = vunpack.c.l.b16 %v645
    %v685 = vpack.c.b16 %v670, %v669
    %v686 = vpack.c.b16 %v672, %v671
    %v687 = vpack.c.b16 %v674, %v673
    %v688 = vpack.c.b16 %v676, %v675
    %v689 = vpack.c.b16 %v678, %v677
    %v690 = vpack.c.b16 %v680, %v679
    %v691 = vpack.c.b16 %v682, %v681
    %v692 = vpack.c.b16 %v684, %v683
    %701 = vmatprep.subr.bf16.mxu0 0
    %702 = vmatpush1.bf16.msra.mxu0 %v692
    %703 = vmatprep.subr.bf16.mxu0 0
    %704 = vmatpush1.bf16.msra.mxu0 %v691
    %705 = vmatprep.subr.bf16.mxu0 0
    %706 = vmatpush1.bf16.msra.mxu0 %v690
    %707 = vmatprep.subr.bf16.mxu0 0
    %708 = vmatpush1.bf16.msra.mxu0 %v689
    %709 = vmatprep.subr.bf16.mxu0 0
    %710 = vmatpush1.bf16.msra.mxu0 %v688
    %711 = vmatprep.subr.bf16.mxu0 0
    %712 = vmatpush1.bf16.msra.mxu0 %v687
    %713 = vmatprep.subr.bf16.mxu0 0
    %714 = vmatpush1.bf16.msra.mxu0 %v686
    %715 = vmatprep.subr.bf16.mxu0 0
    %716 = vmatpush1.bf16.msra.mxu0 %v685
    %717 = vmatprep.subr.bf16.mxu0 0
    %718 = vmatpush2.bf16.msra.mxu0 0
    %719 = vmatprep.subr.bf16.mxu0 0
    %720 = vmatpush2.bf16.msra.mxu0 0
    %721 = vmatprep.subr.bf16.mxu0 0
    %722 = vmatpush2.bf16.msra.mxu0 0
    %723 = vmatprep.subr.bf16.mxu0 0
    %724 = vmatpush2.bf16.msra.mxu0 0
    %725 = vmatprep.subr.bf16.mxu0 0
    %726 = vmatpush2.bf16.msra.mxu0 0
    %727 = vmatprep.subr.bf16.mxu0 0
    %728 = vmatpush2.bf16.msra.mxu0 0
    %729 = vmatprep.subr.bf16.mxu0 0
    %730 = vmatpush2.bf16.msra.mxu0 0
    %731 = vmatprep.subr.bf16.mxu0 0
    %732 = vmatpush2.bf16.msra.mxu0 0
    %733 = vmatprep.mubr.bf16.mxu0 0
    %734 = vmatmul.mubr.bf16.gmra.mxu0 %v629
    %v735 = vpop.f32.mrf.mxu0
    %v736 = vadd.f32 %v651, %v735
    %v737 = vpop.f32.mrf.mxu0
    %v738 = vpop.f32.mrf.mxu0
    %v739 = vpop.f32.mrf.mxu0
    %740 = vdwg.mxu0
    %741 = vst [vmem:[%s5] sm:$0xff] %v736
    %v742 = vlaneseq
    %v743 = vand.u32 %v742, 127
    %vm744 = vcmp.lt.s32.totalorder %v743, 10
    %v745 = vsel %vm744, %v736, -1e+30
    %746 = vmax.xlane.f32.xlu0 %v745
    %v747 = vpop.xlane.xlu0 %746
    %v748 = vsub.f32 %v745, %v747
    %v749 = vmul.f32 %v748, 1.442695
    %v750 = vpow.pop %v749
    %751 = vadd.xlane.f32.xlu0 %v750
    %v752 = vpop.xlane.xlu0 %751
    %v753 = vlog2.pop %v752
    %v754 = vmul.f32 %v753, 0.6931472
    %v755 = vadd.f32 %v747, %v754
    %v756 = vsub.f32 %v736, %v755
    %757 = vst [vmem:[%s6] sm:$0xff] %v756
    // Predicated region
    $region26: #{_lambda_.1} parent=1 // pred_check
      _
    $region27: #{_lambda_.1} parent=1 // pred_check_branch
      %759 = sbr.rel (0) target = $region29
    $region28: #{_lambda_.1} parent=1 // pred_region
      _
    $region29: #{_lambda_.1} parent=1 // pred_fallthru
      _
    // Predicated region
    $region30: #{_lambda_.1} parent=1 // pred_check
      _
    $region31: #{_lambda_.1} parent=1 // pred_check_branch
      %761 = sbr.rel (0) target = $region33
    $region32: #{_lambda_.1} parent=1 // pred_region
      _
    $region33: #{_lambda_.1} parent=1 // pred_fallthru
      _
    // Predicated region
    $region34: #{_lambda_.1} parent=1 // pred_check
      _
    $region35: #{_lambda_.1} parent=1 // pred_check_branch
      %763 = sbr.rel (0) target = $region37
    $region36: #{_lambda_.1} parent=1 // pred_region
      _
    $region37: #{_lambda_.1} parent=1 // pred_fallthru
      _
    // Predicated region
    $region38: #{_lambda_.1} parent=1 // pred_check
      _
    $region39: #{_lambda_.1} parent=1 // pred_check_branch
      %765 = sbr.rel (0) target = $region41
    $region40: #{_lambda_.1} parent=1 // pred_region
      _
    $region41: #{_lambda_.1} parent=1 // pred_fallthru
      _
    %766 = vsyncpa [#allocation3], 1

</llo_original>
